<compile_context>
chip_gen: v6e
topology: v6e:2x2x1
jax: 0.10.0
libtpu: 0.0.40
codegen_flags: <defaults>
</compile_context>

<pallas_src>
import jax
import jax.numpy as jnp
from jax.experimental import pallas as pl
from jax.experimental.pallas import tpu as pltpu


def _round_up(x: int, m: int) -> int:
    return ((x + m - 1) // m) * m


def _cdiv(a: int, b: int) -> int:
    return -(-a // b)


# ----------------------------- kernels --------------------------------------


def _mlp_fused_kernel(x_ref, w_ref, b_ref, o_ref):
    # Single K tile (or whole problem): fused matmul + bias + tanh + store.
    y = jnp.dot(x_ref[...], w_ref[...], preferred_element_type=jnp.float32)
    o_ref[...] = jnp.tanh(y + b_ref[...]).astype(o_ref.dtype)


def _mlp_acc_kernel(x_ref, w_ref, b_ref, o_ref, acc_ref):
    # Fallback for very wide H_in: K tiled (grid axis 2, "arbitrary"),
    # f32 accumulator in VMEM scratch, bias+tanh epilogue on the last K step.
    k = pl.program_id(2)

    @pl.when(k == 0)
    def _():
        acc_ref[...] = jnp.zeros_like(acc_ref)

    acc_ref[...] += jnp.dot(
        x_ref[...], w_ref[...], preferred_element_type=jnp.float32
    )

    @pl.when(k == pl.num_programs(2) - 1)
    def _():
        o_ref[...] = jnp.tanh(acc_ref[...] + b_ref[...]).astype(o_ref.dtype)


# ----------------------------- wrapper ---------------------------------------

_MAX_TM = 1024              # whole (padded) batch in one M tile -> W read once
_MAX_TK = 2048              # K tile cap; poolers (H_in <= 2048) use one K tile
_MAX_TN = 1024              # N tile cap (lane-dense, VMEM friendly)
_VMEM_CAP = 48 * 1024 * 1024  # safe on v7x (64 MiB physical); fine on v5e/v6e


def make_mlp_layer(weight, bias, compute_dtype=jnp.bfloat16):
    """Prepare parameters ONCE (transpose/pad/cast) and return apply(features).

    weight: [H_out, H_in] (PyTorch nn.Linear layout); bias: [H_out].
    """
    H_out, H_in = weight.shape
    assert bias.shape == (H_out,)

    # ---- tiny path: single un-gridded call, no padding, f32 matmul ----------
    if H_in <= 128 and H_out <= 128:
        w_t = jnp.asarray(weight, jnp.float32).T              # [H_in, H_out]
        b2 = jnp.asarray(bias, jnp.float32).reshape(1, H_out)

        def apply_small(features):
            B = features.shape[0]
            return pl.pallas_call(
                _mlp_fused_kernel,
                out_shape=jax.ShapeDtypeStruct((B, H_out), features.dtype),
            )(features.astype(jnp.float32), w_t, b2)

        return apply_small

    # ---- gridded path: tile selection depends only on H_in / H_out ----------
    Hin_p = _round_up(H_in, 128)
    Hout_p = _round_up(H_out, 128)

    nk = _cdiv(Hin_p, _MAX_TK)
    tk = _round_up(_cdiv(Hin_p, nk), 128)
    Hin_pp = nk * tk                       # == Hin_p for H_in <= 2048

    nn = _cdiv(Hout_p, _MAX_TN)
    if nn == 1 and Hout_p >= 256:
        nn = 2                             # >=2 "parallel" N blocks for v7x's 2 TCs
    tn = _round_up(_cdiv(Hout_p, nn), 128)
    Hout_pp = nn * tn

    # Parameters prepared exactly once: transpose -> pad -> cast.
    w_p = jnp.pad(
        jnp.asarray(weight).T, ((0, Hin_pp - H_in), (0, Hout_pp - H_out))
    ).astype(compute_dtype)                                   # [Hin_pp, Hout_pp]
    b_p = jnp.pad(
        jnp.asarray(bias, jnp.float32), (0, Hout_pp - H_out)
    ).reshape(1, Hout_pp)

    csize = jnp.dtype(compute_dtype).itemsize

    def apply(features):
        B = features.shape[0]
        out_dtype = features.dtype
        out_itemsize = jnp.dtype(out_dtype).itemsize

        Bp = _round_up(B, 16)              # bf16 sublane packing
        tm = min(Bp, _MAX_TM)
        grid_m = _cdiv(Bp, tm)
        Bp = grid_m * tm

        x_p = jnp.pad(
            features, ((0, Bp - B), (0, Hin_pp - H_in))
        ).astype(compute_dtype)

        working = (
            2 * tm * tk * csize            # x tiles (double-buffered)
            + 2 * tk * tn * csize          # w tiles (double-buffered)
            + 2 * 1 * tn * 4               # bias tiles
            + 2 * tm * tn * out_itemsize   # output tiles
            + (tm * tn * 4 if nk > 1 else 0)  # f32 accumulator (only if K tiled)
        )
        vmem_limit = int(min(max(2 * working, 16 * 1024 * 1024), _VMEM_CAP))

        if nk == 1:
            # Fused path: grid (M, N), no K axis, no scratch.
            out_p = pl.pallas_call(
                _mlp_fused_kernel,
                out_shape=jax.ShapeDtypeStruct((Bp, Hout_pp), out_dtype),
                grid_spec=pltpu.PrefetchScalarGridSpec(
                    num_scalar_prefetch=0,
                    grid=(grid_m, nn),
                    in_specs=[
                        pl.BlockSpec((tm, tk), lambda i, j: (i, 0)),  # x
                        pl.BlockSpec((tk, tn), lambda i, j: (0, j)),  # w
                        pl.BlockSpec((1, tn), lambda i, j: (0, j)),   # bias
                    ],
                    out_specs=pl.BlockSpec((tm, tn), lambda i, j: (i, j)),
                ),
                compiler_params=pltpu.CompilerParams(
                    dimension_semantics=("parallel", "parallel"),
                    vmem_limit_bytes=vmem_limit,
                ),
            )(x_p, w_p, b_p)
        else:
            # Wide-K fallback: grid (M, N, K) with K last ("arbitrary").
            out_p = pl.pallas_call(
                _mlp_acc_kernel,
                out_shape=jax.ShapeDtypeStruct((Bp, Hout_pp), out_dtype),
                grid_spec=pltpu.PrefetchScalarGridSpec(
                    num_scalar_prefetch=0,
                    grid=(grid_m, nn, nk),
                    in_specs=[
                        pl.BlockSpec((tm, tk), lambda i, j, k: (i, k)),  # x
                        pl.BlockSpec((tk, tn), lambda i, j, k: (k, j)),  # w
                        pl.BlockSpec((1, tn), lambda i, j, k: (0, j)),   # bias
                    ],
                    out_specs=pl.BlockSpec((tm, tn), lambda i, j, k: (i, j)),
                    scratch_shapes=[pltpu.VMEM((tm, tn), jnp.float32)],
                ),
                compiler_params=pltpu.CompilerParams(
                    dimension_semantics=("parallel", "parallel", "arbitrary"),
                    vmem_limit_bytes=vmem_limit,
                ),
            )(x_p, w_p, b_p)

        return out_p[:B, :H_out]

    return apply


def mlp_layer(features, weight, bias):
    """One-shot convenience wrapper. Prefer make_mlp_layer to hoist param prep."""
    return make_mlp_layer(weight, bias)(features)


# ----------------------------- demo / check ----------------------------------

if __name__ == "__main__":
    key = jax.random.PRNGKey(0)
    k1, k2, k3, k4, k5, k6 = jax.random.split(key, 6)

    # Case 1: tiny pooler (config.hidden_size = 32) -> un-gridded single-block path.
    B1, H1 = 8, 32
    f1 = jax.random.normal(k1, (B1, H1), dtype=jnp.float32)
    w1 = jax.random.normal(k2, (H1, H1), dtype=jnp.float32) * 0.02
    b1 = jax.random.normal(k3, (H1,), dtype=jnp.float32) * 0.02

    apply1 = make_mlp_layer(w1, b1)        # param prep done once, outside the call
    out1 = jax.block_until_ready(apply1(f1))
    ref1 = jnp.tanh(f1 @ w1.T + b1)
    assert out1.shape == ref1.shape
    assert jnp.allclose(out1, ref1, atol=5e-3, rtol=5e-3)

    # Case 2: small-but-gridded pooler (hidden = 256) -> fused single-K-tile path,
    # N split into two "parallel" blocks (keeps both v7x TensorCores busy).
    B2, H2 = 8, 256
    f2 = jax.random.normal(k4, (B2, H2), dtype=jnp.float32)
    w2 = jax.random.normal(k5, (H2, H2), dtype=jnp.float32) * 0.02
    b2 = jax.random.normal(k6, (H2,), dtype=jnp.float32) * 0.02

    apply2 = make_mlp_layer(w2, b2)
    out2 = jax.block_until_ready(apply2(f2))
    ref2 = jnp.tanh(f2 @ w2.T + b2)
    assert out2.shape == ref2.shape
    assert jnp.allclose(out2, ref2, atol=1e-2, rtol=1e-2)  # bf16 matmul inputs

    print("KERNEL_OK")
</pallas_src>

<mosaic_0001>
module attributes {stable_mosaic.version = 11 : i64} {
  func.func @_mlp_fused_kernel(%arg0: memref<8x32xf32, #tpu.memory_space<vmem>>, %arg1: memref<32x32xf32, #tpu.memory_space<vmem>>, %arg2: memref<1x32xf32, #tpu.memory_space<vmem>>, %arg3: memref<8x32xf32, #tpu.memory_space<vmem>>) attributes {dimension_semantics = [], scalar_prefetch = 0 : i64, scratch_operands = 0 : i64, tpu.core_type = #tpu.core_type<tc>} {
    %c0 = arith.constant 0 : index
    %c0_0 = arith.constant 0 : index
    %0 = vector.load %arg0[%c0, %c0_0] : memref<8x32xf32, #tpu.memory_space<vmem>>, vector<8x32xf32>
    %c0_1 = arith.constant 0 : index
    %c0_2 = arith.constant 0 : index
    %1 = vector.load %arg1[%c0_1, %c0_2] : memref<32x32xf32, #tpu.memory_space<vmem>>, vector<32x32xf32>
    %cst = arith.constant dense<0.000000e+00> : vector<8x32xf32>
    %2 = tpu.matmul %0, %1, %cst {dimension_numbers = #tpu.dot_dimension_numbers<[1], [0], [0], [1], [0, 0, 1, 1], [], []>} : vector<8x32xf32>, vector<32x32xf32>, vector<8x32xf32> -> vector<8x32xf32>
    %c0_3 = arith.constant 0 : index
    %c0_4 = arith.constant 0 : index
    %3 = vector.load %arg2[%c0_3, %c0_4] : memref<1x32xf32, #tpu.memory_space<vmem>>, vector<1x32xf32>
    %4 = vector.broadcast %3 : vector<1x32xf32> to vector<8x32xf32>
    %5 = arith.addf %2, %4 : vector<8x32xf32>
    %6 = math.tanh %5 : vector<8x32xf32>
    %c0_5 = arith.constant 0 : index
    %c0_6 = arith.constant 0 : index
    %7 = vector.load %arg3[%c0_5, %c0_6] : memref<8x32xf32, #tpu.memory_space<vmem>>, vector<8x32xf32>
    tpu.vector_store %arg3[%c0_5, %c0_6], %6 {strides = array<i32>} : memref<8x32xf32, #tpu.memory_space<vmem>>, vector<8x32xf32>,
    return
  }
}

</mosaic_0001>

<llo_original>
// kernel: tpu_custom_call.1
$region0: #{tpu_custom_call.1}
  #allocation0 [shape = 'u32[]', space=smem, size = 0x4, offset = 0x4, fixed_abs, tag = 'smem constant byte address 0x4 - core index']
  #allocation1 [shape = 'u32[144,128]{1,0:T(1,128)}', space=vmem, size = 0x12000, scoped, tag = 'internal scratch']
  %s0 = inlined_call_operand.hbm [shape: f32[8,32], index: 0, kind: input, shape index: {}]
  %s1 = inlined_call_operand.hbm [shape: f32[32,32], index: 1, kind: input, shape index: {}]
  %s2 = inlined_call_operand.vmem [shape: f32[1,32], index: 2, kind: input, shape index: {}]
  %s3 = inlined_call_operand.hbm [shape: f32[8,32], index: 3, kind: output, shape index: {}]
  %s4 = sld [smem:[#allocation0]]
  $region30: #{tpu_custom_call.1} parent=0
    _
  %s6 = ssub.s32 1, %s4
  %s7 = scalar_select 0, %s6, %s4
  $region1: #{tpu_custom_call.1} parent=0
    #allocation2 [shape = 'u8[4096]{0}', space=vmem, size = 0x1000, scoped, tag = 'input window, operand 0, single buffered']
    #allocation3 [shape = 's32[1]{0}', space=sflag, size = 0x4, scoped, tag = 'scoped memory for tpu_custom_call.1']
    #allocation4 [shape = 's32[1]{0}', space=sflag, size = 0x4, scoped, tag = 'scoped memory for tpu_custom_call.1']
    #allocation5 [shape = 'u8[16384]{0}', space=vmem, size = 0x4000, scoped, tag = 'input window, operand 1, single buffered']
    #allocation6 [shape = 's32[1]{0}', space=sflag, size = 0x4, scoped, tag = 'scoped memory for tpu_custom_call.1']
    #allocation7 [shape = 'u8[4096]{0}', space=vmem, size = 0x1000, scoped, tag = 'output window, operand 0, single buffered']
    %8 = vsyncpa [#allocation3], 0
    %9 = vsyncpa [#allocation6], 0
    %10 = vsyncpa [#allocation4], 0
    // Predicated region
    $region2: #{tpu_custom_call.1} parent=1 // pred_check
      _
    $region3: #{tpu_custom_call.1} parent=1 // pred_check_branch
      %12 = sbr.rel (0) target = $region5
    $region4: #{tpu_custom_call.1} parent=1 // pred_region
      %s14 = ssub.s32 128, 128
      %15 = vsyncadd [#allocation3], %s14
      %s17 = sshll.u32 [#allocation2], 4
      %s18 = int_to_ptr.vmem [resolvable:$true] %s17
      %20 = dma.hbm_to_vmem [thread:$0]  %s0, 128, %s18, [#allocation3]
    $region5: #{tpu_custom_call.1} parent=1 // pred_fallthru
      _
    // Predicated region
    $region6: #{tpu_custom_call.1} parent=1 // pred_check
      _
    $region7: #{tpu_custom_call.1} parent=1 // pred_check_branch
      %22 = sbr.rel (0) target = $region9
    $region8: #{tpu_custom_call.1} parent=1 // pred_region
      %s24 = ssub.s32 512, 512
      %25 = vsyncadd [#allocation6], %s24
      %s26 = sshll.u32 [#allocation5], 4
      %s27 = int_to_ptr.vmem [resolvable:$true] %s26
      %32 = dma.hbm_to_vmem [thread:$0]  %s1, 512, %s27, [#allocation6], 128, 128, 8
    $region9: #{tpu_custom_call.1} parent=1 // pred_fallthru
      _
    // Predicated region
    $region10: #{tpu_custom_call.1} parent=1 // pred_check
      _
    $region11: #{tpu_custom_call.1} parent=1 // pred_check_branch
      %34 = sbr.rel (0) target = $region13
    $region12: #{tpu_custom_call.1} parent=1 // pred_region
      _
    $region13: #{tpu_custom_call.1} parent=1 // pred_fallthru
      _
    // Predicated region
    $region14: #{tpu_custom_call.1} parent=1 // pred_check
      _
    $region15: #{tpu_custom_call.1} parent=1 // pred_check_branch
      %36 = sbr.rel (0) target = $region17
    $region16: #{tpu_custom_call.1} parent=1 // pred_region
      %37 = dma.done [#allocation3], 128
    $region17: #{tpu_custom_call.1} parent=1 // pred_fallthru
      _
    // Predicated region
    $region18: #{tpu_custom_call.1} parent=1 // pred_check
      _
    $region19: #{tpu_custom_call.1} parent=1 // pred_check_branch
      %39 = sbr.rel (0) target = $region21
    $region20: #{tpu_custom_call.1} parent=1 // pred_region
      %40 = dma.done [#allocation6], 512
    $region21: #{tpu_custom_call.1} parent=1 // pred_fallthru
      _
    %v41 = vld [vmem:[#allocation2] sm:$0xff]
    %v42 = vld [vmem:[#allocation5] sm:$0xff]
    %v43 = vld [vmem:[#allocation5 + $0x8] sm:$0xff]
    %v44 = vld [vmem:[#allocation5 + $0x10] sm:$0xff]
    %v45 = vld [vmem:[#allocation5 + $0x18] sm:$0xff]
    %v46 = vld [vmem:[%s2] sm:$0x1]
    %v48 = vlaneseq
    %v49 = vshrl.u32 %v48, 7
    %v50 = vsub.s32 0, %v49
    %v51 = vrot.slane %v46, %v50
    %vm53 = vcmask 261120
    %v55 = vsel %vm53, %v41, 0
    %57 = vmatprep.subr.mxu0 0.0
    %58 = vmatpush1.msra.mxu0 0.0
    %59 = vmatprep.subr.mxu0 0.0
    %60 = vmatpush1.msra.mxu0 0.0
    %61 = vmatprep.subr.mxu0 0.0
    %62 = vmatpush1.msra.mxu0 0.0
    %63 = vmatprep.subr.mxu0 0.0
    %64 = vmatpush1.msra.mxu0 0.0
    %65 = vmatprep.subr.mxu0 0.0
    %66 = vmatpush1.msra.mxu0 0.0
    %67 = vmatprep.subr.mxu0 0.0
    %68 = vmatpush1.msra.mxu0 0.0
    %69 = vmatprep.subr.mxu0 0.0
    %70 = vmatpush1.msra.mxu0 0.0
    %71 = vmatprep.subr.mxu0 0.0
    %72 = vmatpush1.msra.mxu0 0.0
    %73 = vmatprep.subr.mxu0 0.0
    %74 = vmatpush1.msra.mxu0 0.0
    %75 = vmatprep.subr.mxu0 0.0
    %76 = vmatpush1.msra.mxu0 0.0
    %77 = vmatprep.subr.mxu0 0.0
    %78 = vmatpush1.msra.mxu0 0.0
    %79 = vmatprep.subr.mxu0 0.0
    %80 = vmatpush1.msra.mxu0 0.0
    %81 = vmatprep.subr.mxu0 0.0
    %82 = vmatpush1.msra.mxu0 %v45
    %83 = vmatprep.subr.mxu0 0.0
    %84 = vmatpush1.msra.mxu0 %v44
    %85 = vmatprep.subr.mxu0 0.0
    %86 = vmatpush1.msra.mxu0 %v43
    %87 = vmatprep.subr.mxu0 0.0
    %88 = vmatpush1.msra.mxu0 %v42
    %89 = vmatprep.subr.mxu0 0.0
    %90 = vmatpush2.msra.mxu0 0.0
    %91 = vmatprep.subr.mxu0 0.0
    %92 = vmatpush2.msra.mxu0 0.0
    %93 = vmatprep.subr.mxu0 0.0
    %94 = vmatpush2.msra.mxu0 0.0
    %95 = vmatprep.subr.mxu0 0.0
    %96 = vmatpush2.msra.mxu0 0.0
    %97 = vmatprep.subr.mxu0 0.0
    %98 = vmatpush2.msra.mxu0 0.0
    %99 = vmatprep.subr.mxu0 0.0
    %100 = vmatpush2.msra.mxu0 0.0
    %101 = vmatprep.subr.mxu0 0.0
    %102 = vmatpush2.msra.mxu0 0.0
    %103 = vmatprep.subr.mxu0 0.0
    %104 = vmatpush2.msra.mxu0 0.0
    %105 = vmatprep.subr.mxu0 0.0
    %106 = vmatpush2.msra.mxu0 0.0
    %107 = vmatprep.subr.mxu0 0.0
    %108 = vmatpush2.msra.mxu0 0.0
    %109 = vmatprep.subr.mxu0 0.0
    %110 = vmatpush2.msra.mxu0 0.0
    %111 = vmatprep.subr.mxu0 0.0
    %112 = vmatpush2.msra.mxu0 0.0
    %113 = vmatprep.subr.mxu0 0.0
    %114 = vmatpush2.msra.mxu0 0.0
    %115 = vmatprep.subr.mxu0 0.0
    %116 = vmatpush2.msra.mxu0 0.0
    %117 = vmatprep.subr.mxu0 0.0
    %118 = vmatpush2.msra.mxu0 0.0
    %119 = vmatprep.subr.mxu0 0.0
    %120 = vmatpush2.msra.mxu0 0.0
    %121 = vmatprep.mubr.f32.mxu0 0.0
    %122 = vmatmul.mubr.f32.gmra.mxu0 %v55
    %v123 = vpop.f32.mrf.mxu0
    %v124 = vadd.f32 %v51, %v123
    %v125 = vpop.f32.mrf.mxu0
    %126 = vdwg.mxu0
    %v127 = vtanh.pop %v124
    %128 = vst.msk [vmem:[#allocation7] sm:$0xff] %vm53, %v127
    // Predicated region
    $region22: #{tpu_custom_call.1} parent=1 // pred_check
      _
    $region23: #{tpu_custom_call.1} parent=1 // pred_check_branch
      %130 = sbr.rel (0) target = $region25
    $region24: #{tpu_custom_call.1} parent=1 // pred_region
      %s132 = ssub.s32 128, 128
      %133 = vsyncadd [#allocation4], %s132
      %s135 = sshll.u32 [#allocation7], 4
      %s136 = int_to_ptr.vmem [resolvable:$true] %s135
      %138 = dma.vmem_to_hbm [thread:$0]  %s136, 128, %s3, [#allocation4]
    $region25: #{tpu_custom_call.1} parent=1 // pred_fallthru
      _
    // Predicated region
    $region26: #{tpu_custom_call.1} parent=1 // pred_check
      _
    $region27: #{tpu_custom_call.1} parent=1 // pred_check_branch
      %140 = sbr.rel (0) target = $region29
    $region28: #{tpu_custom_call.1} parent=1 // pred_region
      %141 = dma.done [#allocation4], 128
    $region29: #{tpu_custom_call.1} parent=1 // pred_fallthru
      _
    %142 = vsyncpa [#allocation3], 1
    %143 = vsyncpa [#allocation6], 1
    %144 = vsyncpa [#allocation4], 1

</llo_original>
